<compile_context>
chip_gen: v7x
topology: tpu7x:2x2x1
jax: 0.10.0
libtpu: 0.0.40
codegen_flags: <defaults>
</compile_context>

<pallas_src>
import jax
import jax.numpy as jnp
from jax import lax
from jax.experimental import pallas as pl
from jax.experimental.pallas import tpu as pltpu

_LANE = 128          # lane granule for the batch axis of the output
_MAX_TILE = 2048     # max batch rows per grid step (amortizes ~0.35us/step)


def _round_up(n, m):
    return ((n + m - 1) // m) * m


def _pick_batch_tiling(batch):
    """Pad the batch to the 128-lane granule and pick a tile that divides it.

    Prefers >= 2 tiles (so v7x's two TensorCores both get work) and tiles as
    large as possible (<= _MAX_TILE) to amortize per-grid-step overhead.
    Worst-case padding waste is < 128 rows.
    """
    b_pad = _round_up(batch, _LANE)
    blocks = b_pad // _LANE
    if blocks <= 1:
        return b_pad, _LANE
    max_g = min(_MAX_TILE // _LANE, blocks // 2)   # >= 2 tiles
    for g in range(max_g, 0, -1):
        if blocks % g == 0:
            return b_pad, g * _LANE
    return b_pad, _LANE


def _policy_kernel(x_ref, w1_ref, b1_ref, w2t_ref, b2t_ref, o_ref):
    # fc1 + ReLU: (tile, S) @ (S, H) -> (tile, H), f32 MXU accumulation,
    # f32 bias/ReLU on the VPU.
    h = jnp.dot(x_ref[...], w1_ref[...], preferred_element_type=jnp.float32)
    h = jnp.maximum(h + b1_ref[...], 0.0)

    # fc2 directly in transposed-output form: (A, tile) = W2^T (A, H) against
    # h (tile, H) contracted on their last dims (NT dimension numbers, same
    # pattern as q @ k^T in flash attention). Batch lands on the lane axis,
    # so the store below is lane-dense with zero pad columns.
    logits_t = lax.dot_general(
        w2t_ref[...], h, (((1,), (1,)), ((), ())),
        preferred_element_type=jnp.float32)
    logits_t = logits_t + b2t_ref[...]            # (A, 1) broadcast over lanes

    # Numerically-stable softmax over the action axis (sublane axis, size A).
    m = jnp.max(logits_t, axis=0, keepdims=True)          # XLU reduce
    e = jnp.exp(logits_t - m)                              # EUP, A*tile elems
    denom = jnp.sum(e, axis=0, keepdims=True)
    o_ref[...] = (e / denom).astype(o_ref.dtype)           # exact normalization


def _xla_forward(x, w1, b1, w2, b2):
    """Pure-JAX reference / small-batch path."""
    h = jnp.maximum(x @ w1 + b1.reshape(1, -1), 0.0)
    return jax.nn.softmax(h @ w2 + b2.reshape(1, -1), axis=1)


def policy_net_forward(x, w1, b1, w2, b2, *, use_pallas=None):
    """PolicyNet forward: softmax(relu(x @ w1 + b1) @ w2 + b2, dim=1).

    x: (B, state_dim) f32. w1: (S, H), b1: (H,), w2: (H, A), b2: (A,).
    Returns (B, action_dim) f32 probabilities.
    """
    B, S = x.shape
    H = w1.shape[1]
    A = w2.shape[1]

    if use_pallas is None:
        # A single-grid-step pallas_call is pure launch + DMA-setup overhead
        # for sub-microsecond math; let XLA fuse tiny batches directly.
        use_pallas = B >= 256
    if not use_pallas:
        return _xla_forward(x, w1, b1, w2, b2)

    B_pad, tn = _pick_batch_tiling(B)

    # Row-pad x only when needed (<= 127 rows of zeros; finite outputs that
    # are sliced off below). No dtype cast, no action-dim padding.
    if B_pad != B:
        x_in = jnp.zeros((B_pad, S), x.dtype).at[:B].set(x)
    else:
        x_in = x

    w1_in = w1.astype(jnp.float32)                    # (S, H)
    b1_in = b1.reshape(1, H).astype(jnp.float32)      # (1, H)
    w2t_in = w2.T.astype(jnp.float32)                 # (A, H)  tiny, one-time
    b2t_in = b2.reshape(A, 1).astype(jnp.float32)     # (A, 1)

    cost = pl.CostEstimate(
        flops=2 * B_pad * (S * H + H * A),
        transcendentals=B_pad * A,
        bytes_accessed=(x_in.size * 4 + w1_in.size * 4 + b1_in.size * 4
                        + w2t_in.size * 4 + b2t_in.size * 4 + A * B_pad * 4),
    )

    out_t = pl.pallas_call(
        _policy_kernel,
        out_shape=jax.ShapeDtypeStruct((A, B_pad), jnp.float32),
        grid=(B_pad // tn,),
        in_specs=[
            pl.BlockSpec((tn, S), lambda i: (i, 0)),   # x: batch-tiled (sublanes)
            pl.BlockSpec((S, H), lambda i: (0, 0)),    # weights / biases stay
            pl.BlockSpec((1, H), lambda i: (0, 0)),    #   VMEM-resident across
            pl.BlockSpec((A, H), lambda i: (0, 0)),    #   the batch grid
            pl.BlockSpec((A, 1), lambda i: (0, 0)),
        ],
        # Lane-dense output, batch on lanes, no pad columns.
        out_specs=pl.BlockSpec((A, tn), lambda i: (0, i)),
        compiler_params=pltpu.CompilerParams(
            dimension_semantics=("parallel",)),        # v7x: tiles across 2 TCs
        cost_estimate=cost,
    )(x_in, w1_in, b1_in, w2t_in, b2t_in)

    # (A, B_pad) -> (B, A); this touches only A*B f32 (32 B/row), far cheaper
    # than the previous 128-lane-padded writeback + strided slice.
    return out_t[:, :B].T


def init_params(key, state_dim, hidden_dim, action_dim):
    """PyTorch-style Linear init (uniform +-1/sqrt(fan_in)); weights stored
    transposed ((in, out)) so the forward is x @ W + b."""
    k1, k2, k3, k4 = jax.random.split(key, 4)
    lim1 = 1.0 / jnp.sqrt(jnp.float32(state_dim))
    lim2 = 1.0 / jnp.sqrt(jnp.float32(hidden_dim))
    w1 = jax.random.uniform(k1, (state_dim, hidden_dim), jnp.float32, -lim1, lim1)
    b1 = jax.random.uniform(k2, (hidden_dim,), jnp.float32, -lim1, lim1)
    w2 = jax.random.uniform(k3, (hidden_dim, action_dim), jnp.float32, -lim2, lim2)
    b2 = jax.random.uniform(k4, (action_dim,), jnp.float32, -lim2, lim2)
    return w1, b1, w2, b2


if __name__ == "__main__":
    # Small shapes consistent with the module's forward: (batch, state_dim).
    state_dim, hidden_dim, action_dim = 16, 32, 8

    key = jax.random.PRNGKey(0)
    k_x, k_x2, k_p = jax.random.split(key, 3)
    w1, b1, w2, b2 = init_params(k_p, state_dim, hidden_dim, action_dim)

    # Small demo batch, forced through the Pallas path (single 128-row tile).
    x_small = jax.random.normal(k_x, (8, state_dim), jnp.float32)
    probs = jax.block_until_ready(
        policy_net_forward(x_small, w1, b1, w2, b2, use_pallas=True))
    ref = _xla_forward(x_small, w1, b1, w2, b2)
    assert probs.shape == (8, action_dim)
    assert jnp.allclose(probs, ref, atol=1e-3, rtol=1e-3)
    assert jnp.allclose(jnp.sum(probs, axis=1), 1.0, atol=1e-5)

    # Multi-tile batch: exercises the grid, tiling choice and parallel axis.
    x_big = jax.random.normal(k_x2, (384, state_dim), jnp.float32)
    probs_big = jax.block_until_ready(
        policy_net_forward(x_big, w1, b1, w2, b2, use_pallas=True))
    ref_big = _xla_forward(x_big, w1, b1, w2, b2)
    assert probs_big.shape == (384, action_dim)
    assert jnp.allclose(probs_big, ref_big, atol=1e-3, rtol=1e-3)
    assert jnp.allclose(jnp.sum(probs_big, axis=1), 1.0, atol=1e-5)

    print("KERNEL_OK")
</pallas_src>

<mosaic_0001>
module attributes {stable_mosaic.version = 11 : i64} {
  func.func @_policy_kernel(%arg0: i32, %arg1: memref<128x16xf32, #tpu.memory_space<vmem>>, %arg2: memref<16x32xf32, #tpu.memory_space<vmem>>, %arg3: memref<1x32xf32, #tpu.memory_space<vmem>>, %arg4: memref<8x32xf32, #tpu.memory_space<vmem>>, %arg5: memref<8x1xf32, #tpu.memory_space<vmem>>, %arg6: memref<8x128xf32, #tpu.memory_space<vmem>>) attributes {dimension_semantics = [#tpu.dimension_semantics<parallel>], iteration_bounds = array<i64: 1>, scalar_prefetch = 0 : i64, scratch_operands = 0 : i64, tpu.core_type = #tpu.core_type<tc>, window_params = [{transform_indices = @transform_0, window_bounds = array<i64: 128, 16>}, {pipeline_mode = #tpu.pipeline_mode<synchronous>, transform_indices = @transform_1, window_bounds = array<i64: 16, 32>}, {pipeline_mode = #tpu.pipeline_mode<synchronous>, transform_indices = @transform_2, window_bounds = array<i64: 1, 32>}, {pipeline_mode = #tpu.pipeline_mode<synchronous>, transform_indices = @transform_3, window_bounds = array<i64: 8, 32>}, {pipeline_mode = #tpu.pipeline_mode<synchronous>, transform_indices = @transform_4, window_bounds = array<i64: 8, 1>}, {transform_indices = @transform_5, window_bounds = array<i64: 8, 128>}]} {
    %c0 = arith.constant 0 : index
    %c0_0 = arith.constant 0 : index
    %0 = vector.load %arg1[%c0, %c0_0] : memref<128x16xf32, #tpu.memory_space<vmem>>, vector<128x16xf32>
    %c0_1 = arith.constant 0 : index
    %c0_2 = arith.constant 0 : index
    %1 = vector.load %arg2[%c0_1, %c0_2] : memref<16x32xf32, #tpu.memory_space<vmem>>, vector<16x32xf32>
    %cst = arith.constant dense<0.000000e+00> : vector<128x32xf32>
    %2 = tpu.matmul %0, %1, %cst {dimension_numbers = #tpu.dot_dimension_numbers<[1], [0], [0], [1], [0, 0, 1, 1], [], []>} : vector<128x16xf32>, vector<16x32xf32>, vector<128x32xf32> -> vector<128x32xf32>
    %c0_3 = arith.constant 0 : index
    %c0_4 = arith.constant 0 : index
    %3 = vector.load %arg3[%c0_3, %c0_4] : memref<1x32xf32, #tpu.memory_space<vmem>>, vector<1x32xf32>
    %4 = vector.broadcast %3 : vector<1x32xf32> to vector<128x32xf32>
    %5 = arith.addf %2, %4 : vector<128x32xf32>
    %cst_5 = arith.constant 0.000000e+00 : f32
    %6 = vector.broadcast %cst_5 : f32 to vector<128x32xf32>
    %7 = arith.maximumf %5, %6 : vector<128x32xf32>
    %c0_6 = arith.constant 0 : index
    %c0_7 = arith.constant 0 : index
    %8 = vector.load %arg4[%c0_6, %c0_7] : memref<8x32xf32, #tpu.memory_space<vmem>>, vector<8x32xf32>
    %cst_8 = arith.constant dense<0.000000e+00> : vector<8x128xf32>
    %9 = tpu.matmul %8, %7, %cst_8 {dimension_numbers = #tpu.dot_dimension_numbers<[1], [1], [0], [0], [0, 0, 1, 0], [], []>} : vector<8x32xf32>, vector<128x32xf32>, vector<8x128xf32> -> vector<8x128xf32>
    %c0_9 = arith.constant 0 : index
    %c0_10 = arith.constant 0 : index
    %10 = vector.load %arg5[%c0_9, %c0_10] : memref<8x1xf32, #tpu.memory_space<vmem>>, vector<8x1xf32>
    %11 = vector.broadcast %10 : vector<8x1xf32> to vector<8x128xf32>
    %12 = arith.addf %9, %11 : vector<8x128xf32>
    %cst_11 = arith.constant dense<0xFF800000> : vector<128xf32>
    %13 = vector.multi_reduction <maximumf>, %12, %cst_11 [0] : vector<8x128xf32> to vector<128xf32>
    %14 = vector.shape_cast %13 : vector<128xf32> to vector<1x128xf32>
    %15 = vector.broadcast %14 : vector<1x128xf32> to vector<8x128xf32>
    %16 = arith.subf %12, %15 : vector<8x128xf32>
    %17 = math.exp %16 : vector<8x128xf32>
    %cst_12 = arith.constant dense<0.000000e+00> : vector<128xf32>
    %18 = vector.multi_reduction <add>, %17, %cst_12 [0] : vector<8x128xf32> to vector<128xf32>
    %19 = vector.shape_cast %18 : vector<128xf32> to vector<1x128xf32>
    %20 = vector.broadcast %19 : vector<1x128xf32> to vector<8x128xf32>
    %21 = arith.divf %17, %20 : vector<8x128xf32>
    %c0_13 = arith.constant 0 : index
    %c0_14 = arith.constant 0 : index
    %22 = vector.load %arg6[%c0_13, %c0_14] : memref<8x128xf32, #tpu.memory_space<vmem>>, vector<8x128xf32>
    tpu.vector_store %arg6[%c0_13, %c0_14], %21 {strides = array<i32>} : memref<8x128xf32, #tpu.memory_space<vmem>>, vector<8x128xf32>,
    return
  }
  func.func @transform_0(%arg0: i32) -> (i32, i32) {
    %c0_i32 = arith.constant 0 : i32
    %c0_i32_0 = arith.constant 0 : i32
    return %arg0, %c0_i32 : i32, i32
  }
  func.func @transform_1(%arg0: i32) -> (i32, i32) {
    %c0_i32 = arith.constant 0 : i32
    %c0_i32_0 = arith.constant 0 : i32
    %c0_i32_1 = arith.constant 0 : i32
    return %c0_i32, %c0_i32_0 : i32, i32
  }
  func.func @transform_2(%arg0: i32) -> (i32, i32) {
    %c0_i32 = arith.constant 0 : i32
    %c0_i32_0 = arith.constant 0 : i32
    %c0_i32_1 = arith.constant 0 : i32
    return %c0_i32, %c0_i32_0 : i32, i32
  }
  func.func @transform_3(%arg0: i32) -> (i32, i32) {
    %c0_i32 = arith.constant 0 : i32
    %c0_i32_0 = arith.constant 0 : i32
    %c0_i32_1 = arith.constant 0 : i32
    return %c0_i32, %c0_i32_0 : i32, i32
  }
  func.func @transform_4(%arg0: i32) -> (i32, i32) {
    %c0_i32 = arith.constant 0 : i32
    %c0_i32_0 = arith.constant 0 : i32
    %c0_i32_1 = arith.constant 0 : i32
    return %c0_i32, %c0_i32_0 : i32, i32
  }
  func.func @transform_5(%arg0: i32) -> (i32, i32) {
    %c0_i32 = arith.constant 0 : i32
    %c0_i32_0 = arith.constant 0 : i32
    return %c0_i32, %arg0 : i32, i32
  }
}

</mosaic_0001>

<llo_original>
// kernel: tpu_custom_call.1
$region0: #{tpu_custom_call.1}
  #allocation0 [shape = 'u32[]', space=smem, size = 0x4, offset = 0x4, fixed_abs, tag = 'smem constant byte address 0x4 - core index']
  #allocation1 [shape = 'u32[144,128]{1,0:T(1,128)}', space=vmem, size = 0x12000, scoped, tag = 'internal scratch']
  %s0 = inlined_call_operand.vmem [shape: f32[128,16], index: 0, kind: input, shape index: {}]
  %s1 = inlined_call_operand.vmem [shape: f32[16,32], index: 1, kind: input, shape index: {}]
  %s2 = inlined_call_operand.vmem [shape: f32[1,32], index: 2, kind: input, shape index: {}]
  %s3 = inlined_call_operand.vmem [shape: f32[8,32], index: 3, kind: input, shape index: {}]
  %s4 = inlined_call_operand.vmem [shape: f32[8,1], index: 4, kind: input, shape index: {}]
  %s5 = inlined_call_operand.hbm [shape: f32[8,128], index: 5, kind: output, shape index: {}]
  %s6 = sld [smem:[#allocation0]]
  $region30: #{tpu_custom_call.1} parent=0
    _
  %s8 = ssub.s32 1, %s6
  %s9 = scalar_select 0, %s8, %s6
  $region1: #{tpu_custom_call.1} parent=0
    #allocation2 [shape = 'u8[4096]{0}', space=vmem, size = 0x1000, scoped, tag = 'output window, operand 0, single buffered']
    #allocation3 [shape = 's32[1]{0}', space=sflag, size = 0x4, scoped, tag = 'scoped memory for tpu_custom_call.1']
    %10 = vsyncpa [#allocation3], 0
    // Predicated region
    $region2: #{tpu_custom_call.1} parent=1 // pred_check
      _
    $region3: #{tpu_custom_call.1} parent=1 // pred_check_branch
      %12 = sbr.rel (0) target = $region5
    $region4: #{tpu_custom_call.1} parent=1 // pred_region
      _
    $region5: #{tpu_custom_call.1} parent=1 // pred_fallthru
      _
    // Predicated region
    $region6: #{tpu_custom_call.1} parent=1 // pred_check
      _
    $region7: #{tpu_custom_call.1} parent=1 // pred_check_branch
      %14 = sbr.rel (0) target = $region9
    $region8: #{tpu_custom_call.1} parent=1 // pred_region
      _
    $region9: #{tpu_custom_call.1} parent=1 // pred_fallthru
      _
    // Predicated region
    $region10: #{tpu_custom_call.1} parent=1 // pred_check
      _
    $region11: #{tpu_custom_call.1} parent=1 // pred_check_branch
      %16 = sbr.rel (0) target = $region13
    $region12: #{tpu_custom_call.1} parent=1 // pred_region
      _
    $region13: #{tpu_custom_call.1} parent=1 // pred_fallthru
      _
    // Predicated region
    $region14: #{tpu_custom_call.1} parent=1 // pred_check
      _
    $region15: #{tpu_custom_call.1} parent=1 // pred_check_branch
      %18 = sbr.rel (0) target = $region17
    $region16: #{tpu_custom_call.1} parent=1 // pred_region
      _
    $region17: #{tpu_custom_call.1} parent=1 // pred_fallthru
      _
    // Predicated region
    $region18: #{tpu_custom_call.1} parent=1 // pred_check
      _
    $region19: #{tpu_custom_call.1} parent=1 // pred_check_branch
      %20 = sbr.rel (0) target = $region21
    $region20: #{tpu_custom_call.1} parent=1 // pred_region
      _
    $region21: #{tpu_custom_call.1} parent=1 // pred_fallthru
      _
    %v21 = vld [vmem:[%s0] sm:$0xff]
    %v22 = vld [vmem:[%s0 + $0x8] sm:$0xff]
    %v23 = vld [vmem:[%s0 + $0x10] sm:$0xff]
    %v24 = vld [vmem:[%s0 + $0x18] sm:$0xff]
    %v25 = vld [vmem:[%s0 + $0x20] sm:$0xff]
    %v26 = vld [vmem:[%s0 + $0x28] sm:$0xff]
    %v27 = vld [vmem:[%s0 + $0x30] sm:$0xff]
    %v28 = vld [vmem:[%s0 + $0x38] sm:$0xff]
    %v29 = vld [vmem:[%s0 + $0x40] sm:$0xff]
    %v30 = vld [vmem:[%s0 + $0x48] sm:$0xff]
    %v31 = vld [vmem:[%s0 + $0x50] sm:$0xff]
    %v32 = vld [vmem:[%s0 + $0x58] sm:$0xff]
    %v33 = vld [vmem:[%s0 + $0x60] sm:$0xff]
    %v34 = vld [vmem:[%s0 + $0x68] sm:$0xff]
    %v35 = vld [vmem:[%s0 + $0x70] sm:$0xff]
    %v36 = vld [vmem:[%s0 + $0x78] sm:$0xff]
    %v37 = vld [vmem:[%s1] sm:$0xff]
    %v38 = vld [vmem:[%s1 + $0x8] sm:$0xff]
    %v39 = vld [vmem:[%s2] sm:$0x1]
    %v41 = vlaneseq
    %v42 = vshrl.u32 %v41, 7
    %v43 = vsub.s32 0, %v42
    %v44 = vrot.slane %v39, %v43
    %vm46 = vcmask 130048
    %v48 = vsel %vm46, %v21, 0
    %v51 = vsel %vm46, %v22, 0
    %v54 = vsel %vm46, %v23, 0
    %v57 = vsel %vm46, %v24, 0
    %v60 = vsel %vm46, %v25, 0
    %v63 = vsel %vm46, %v26, 0
    %v66 = vsel %vm46, %v27, 0
    %v69 = vsel %vm46, %v28, 0
    %v72 = vsel %vm46, %v29, 0
    %v75 = vsel %vm46, %v30, 0
    %v78 = vsel %vm46, %v31, 0
    %v81 = vsel %vm46, %v32, 0
    %v84 = vsel %vm46, %v33, 0
    %v87 = vsel %vm46, %v34, 0
    %v90 = vsel %vm46, %v35, 0
    %v93 = vsel %vm46, %v36, 0
    %95 = vmatprep.subr.mxu0 0.0
    %96 = vmatpush1.msra.mxu0 %v37
    %97 = vmatprep.subr.mxu0 0.0
    %98 = vmatpush1.msra.mxu0 %v38
    %99 = vmatprep.subr.mxu0 0.0
    %100 = vmatpush1.msra.mxu0 0.0
    %101 = vmatprep.subr.mxu0 0.0
    %102 = vmatpush1.msra.mxu0 0.0
    %103 = vmatprep.subr.mxu0 0.0
    %104 = vmatpush1.msra.mxu0 0.0
    %105 = vmatprep.subr.mxu0 0.0
    %106 = vmatpush1.msra.mxu0 0.0
    %107 = vmatprep.subr.mxu0 0.0
    %108 = vmatpush1.msra.mxu0 0.0
    %109 = vmatprep.subr.mxu0 0.0
    %110 = vmatpush1.msra.mxu0 0.0
    %111 = vmatprep.subr.mxu0 0.0
    %112 = vmatpush1.msra.mxu0 0.0
    %113 = vmatprep.subr.mxu0 0.0
    %114 = vmatpush1.msra.mxu0 0.0
    %115 = vmatprep.subr.mxu0 0.0
    %116 = vmatpush1.msra.mxu0 0.0
    %117 = vmatprep.subr.mxu0 0.0
    %118 = vmatpush1.msra.mxu0 0.0
    %119 = vmatprep.subr.mxu0 0.0
    %120 = vmatpush1.msra.mxu0 0.0
    %121 = vmatprep.subr.mxu0 0.0
    %122 = vmatpush1.msra.mxu0 0.0
    %123 = vmatprep.subr.mxu0 0.0
    %124 = vmatpush1.msra.mxu0 0.0
    %125 = vmatprep.subr.mxu0 0.0
    %126 = vmatpush1.msra.mxu0 0.0
    %127 = vmatprep.subr.mxu0 0.0
    %128 = vmatpush1.msra.mxu0 0.0
    %129 = vmatprep.subr.mxu0 0.0
    %130 = vmatpush1.msra.mxu0 0.0
    %131 = vmatprep.subr.mxu0 0.0
    %132 = vmatpush1.msra.mxu0 0.0
    %133 = vmatprep.subr.mxu0 0.0
    %134 = vmatpush1.msra.mxu0 0.0
    %135 = vmatprep.subr.mxu0 0.0
    %136 = vmatpush1.msra.mxu0 0.0
    %137 = vmatprep.subr.mxu0 0.0
    %138 = vmatpush1.msra.mxu0 0.0
    %139 = vmatprep.subr.mxu0 0.0
    %140 = vmatpush1.msra.mxu0 0.0
    %141 = vmatprep.subr.mxu0 0.0
    %142 = vmatpush1.msra.mxu0 0.0
    %143 = vmatprep.subr.mxu0 0.0
    %144 = vmatpush1.msra.mxu0 0.0
    %145 = vmatprep.subr.mxu0 0.0
    %146 = vmatpush1.msra.mxu0 0.0
    %147 = vmatprep.subr.mxu0 0.0
    %148 = vmatpush1.msra.mxu0 0.0
    %149 = vmatprep.subr.mxu0 0.0
    %150 = vmatpush1.msra.mxu0 0.0
    %151 = vmatprep.subr.mxu0 0.0
    %152 = vmatpush1.msra.mxu0 0.0
    %153 = vmatprep.subr.mxu0 0.0
    %154 = vmatpush1.msra.mxu0 0.0
    %155 = vmatprep.subr.mxu0 0.0
    %156 = vmatpush1.msra.mxu0 0.0
    %157 = vmatprep.subr.mxu0 0.0
    %158 = vmatpush1.msra.mxu0 0.0
    %159 = vmatprep.mubr.f32.mxu0 0.0
    %160 = vmatmul.mubr.f32.gmra.mrb[0].mxu0 %v48
    %v161 = vpop.f32.mrb[0].mxu0
    %v162 = vadd.f32 %v44, %v161
    %v163 = vpop.f32.mrb[0].mxu0
    %164 = vmatprep.mubr.f32.mxu0 0.0
    %165 = vmatmul.mubr.f32.gmra.mrb[0].mxu0 %v51
    %v166 = vpop.f32.mrb[0].mxu0
    %v167 = vadd.f32 %v44, %v166
    %v168 = vpop.f32.mrb[0].mxu0
    %169 = vmatprep.mubr.f32.mxu0 0.0
    %170 = vmatmul.mubr.f32.gmra.mrb[0].mxu0 %v54
    %v171 = vpop.f32.mrb[0].mxu0
    %v172 = vadd.f32 %v44, %v171
    %v173 = vpop.f32.mrb[0].mxu0
    %174 = vmatprep.mubr.f32.mxu0 0.0
    %175 = vmatmul.mubr.f32.gmra.mrb[0].mxu0 %v57
    %v176 = vpop.f32.mrb[0].mxu0
    %v177 = vadd.f32 %v44, %v176
    %v178 = vpop.f32.mrb[0].mxu0
    %179 = vmatprep.mubr.f32.mxu0 0.0
    %180 = vmatmul.mubr.f32.gmra.mrb[0].mxu0 %v60
    %v181 = vpop.f32.mrb[0].mxu0
    %v182 = vadd.f32 %v44, %v181
    %v183 = vpop.f32.mrb[0].mxu0
    %184 = vmatprep.mubr.f32.mxu0 0.0
    %185 = vmatmul.mubr.f32.gmra.mrb[0].mxu0 %v63
    %v186 = vpop.f32.mrb[0].mxu0
    %v187 = vadd.f32 %v44, %v186
    %v188 = vpop.f32.mrb[0].mxu0
    %189 = vmatprep.mubr.f32.mxu0 0.0
    %190 = vmatmul.mubr.f32.gmra.mrb[0].mxu0 %v66
    %v191 = vpop.f32.mrb[0].mxu0
    %v192 = vadd.f32 %v44, %v191
    %v193 = vpop.f32.mrb[0].mxu0
    %194 = vmatprep.mubr.f32.mxu0 0.0
    %195 = vmatmul.mubr.f32.gmra.mrb[0].mxu0 %v69
    %v196 = vpop.f32.mrb[0].mxu0
    %v197 = vadd.f32 %v44, %v196
    %v198 = vpop.f32.mrb[0].mxu0
    %199 = vmatprep.mubr.f32.mxu0 0.0
    %200 = vmatmul.mubr.f32.gmra.mrb[0].mxu0 %v72
    %v201 = vpop.f32.mrb[0].mxu0
    %v202 = vadd.f32 %v44, %v201
    %v203 = vpop.f32.mrb[0].mxu0
    %204 = vmatprep.mubr.f32.mxu0 0.0
    %205 = vmatmul.mubr.f32.gmra.mrb[0].mxu0 %v75
    %v206 = vpop.f32.mrb[0].mxu0
    %v207 = vadd.f32 %v44, %v206
    %v208 = vpop.f32.mrb[0].mxu0
    %209 = vmatprep.mubr.f32.mxu0 0.0
    %210 = vmatmul.mubr.f32.gmra.mrb[0].mxu0 %v78
    %v211 = vpop.f32.mrb[0].mxu0
    %v212 = vadd.f32 %v44, %v211
    %v213 = vpop.f32.mrb[0].mxu0
    %214 = vmatprep.mubr.f32.mxu0 0.0
    %215 = vmatmul.mubr.f32.gmra.mrb[0].mxu0 %v81
    %v216 = vpop.f32.mrb[0].mxu0
    %v217 = vadd.f32 %v44, %v216
    %v218 = vpop.f32.mrb[0].mxu0
    %219 = vmatprep.mubr.f32.mxu0 0.0
    %220 = vmatmul.mubr.f32.gmra.mrb[0].mxu0 %v84
    %v221 = vpop.f32.mrb[0].mxu0
    %v222 = vadd.f32 %v44, %v221
    %v223 = vpop.f32.mrb[0].mxu0
    %224 = vmatprep.mubr.f32.mxu0 0.0
    %225 = vmatmul.mubr.f32.gmra.mrb[0].mxu0 %v87
    %v226 = vpop.f32.mrb[0].mxu0
    %v227 = vadd.f32 %v44, %v226
    %v228 = vpop.f32.mrb[0].mxu0
    %229 = vmatprep.mubr.f32.mxu0 0.0
    %230 = vmatmul.mubr.f32.gmra.mrb[0].mxu0 %v90
    %v231 = vpop.f32.mrb[0].mxu0
    %v232 = vadd.f32 %v44, %v231
    %v233 = vpop.f32.mrb[0].mxu0
    %234 = vmatprep.mubr.f32.mxu0 0.0
    %235 = vmatmul.mubr.f32.gmra.mrb[0].mxu0 %v93
    %v236 = vpop.f32.mrb[0].mxu0
    %v237 = vadd.f32 %v44, %v236
    %v238 = vpop.f32.mrb[0].mxu0
    %239 = vdwg.mxu0
    %v240 = vmax.f32 %v162, 0.0
    %v241 = vmax.f32 %v167, 0.0
    %v242 = vmax.f32 %v172, 0.0
    %v243 = vmax.f32 %v177, 0.0
    %v244 = vmax.f32 %v182, 0.0
    %v245 = vmax.f32 %v187, 0.0
    %v246 = vmax.f32 %v192, 0.0
    %v247 = vmax.f32 %v197, 0.0
    %v248 = vmax.f32 %v202, 0.0
    %v249 = vmax.f32 %v207, 0.0
    %v250 = vmax.f32 %v212, 0.0
    %v251 = vmax.f32 %v217, 0.0
    %v252 = vmax.f32 %v222, 0.0
    %v253 = vmax.f32 %v227, 0.0
    %v254 = vmax.f32 %v232, 0.0
    %v255 = vmax.f32 %v237, 0.0
    %v256 = vld [vmem:[%s3] sm:$0xff]
    %v257 = vld [vmem:[%s4] sm:$0xff]
    %259 = vset.pattern.permute.xlu0 0
    %260 = vperm.xlu0 %259, %v257
    %v261 = vpop.permute.xlu0 %260
    %vm263 = vcmask 261120
    %v265 = vsel %vm263, %v256, 0
    %v268 = vsel %vm263, %v240, 0
    %v271 = vsel %vm263, %v241, 0
    %v274 = vsel %vm263, %v242, 0
    %v277 = vsel %vm263, %v243, 0
    %v280 = vsel %vm263, %v244, 0
    %v283 = vsel %vm263, %v245, 0
    %v286 = vsel %vm263, %v246, 0
    %v289 = vsel %vm263, %v247, 0
    %v292 = vsel %vm263, %v248, 0
    %v295 = vsel %vm263, %v249, 0
    %v298 = vsel %vm263, %v250, 0
    %v301 = vsel %vm263, %v251, 0
    %v304 = vsel %vm263, %v252, 0
    %v307 = vsel %vm263, %v253, 0
    %v310 = vsel %vm263, %v254, 0
    %v313 = vsel %vm263, %v255, 0
    %315 = vmatprep.subr.mxu0 0.0
    %316 = vmatpush1.xpose.msra.mxu0 %v268
    %317 = vmatprep.subr.mxu0 0.0
    %318 = vmatpush1.xpose.msra.mxu0 %v271
    %319 = vmatprep.subr.mxu0 0.0
    %320 = vmatpush1.xpose.msra.mxu0 %v274
    %321 = vmatprep.subr.mxu0 0.0
    %322 = vmatpush1.xpose.msra.mxu0 %v277
    %323 = vmatprep.subr.mxu0 0.0
    %324 = vmatpush1.xpose.msra.mxu0 %v280
    %325 = vmatprep.subr.mxu0 0.0
    %326 = vmatpush1.xpose.msra.mxu0 %v283
    %327 = vmatprep.subr.mxu0 0.0
    %328 = vmatpush1.xpose.msra.mxu0 %v286
    %329 = vmatprep.subr.mxu0 0.0
    %330 = vmatpush1.xpose.msra.mxu0 %v289
    %331 = vmatprep.subr.mxu0 0.0
    %332 = vmatpush1.xpose.msra.mxu0 %v292
    %333 = vmatprep.subr.mxu0 0.0
    %334 = vmatpush1.xpose.msra.mxu0 %v295
    %335 = vmatprep.subr.mxu0 0.0
    %336 = vmatpush1.xpose.msra.mxu0 %v298
    %337 = vmatprep.subr.mxu0 0.0
    %338 = vmatpush1.xpose.msra.mxu0 %v301
    %339 = vmatprep.subr.mxu0 0.0
    %340 = vmatpush1.xpose.msra.mxu0 %v304
    %341 = vmatprep.subr.mxu0 0.0
    %342 = vmatpush1.xpose.msra.mxu0 %v307
    %343 = vmatprep.subr.mxu0 0.0
    %344 = vmatpush1.xpose.msra.mxu0 %v310
    %345 = vmatprep.subr.mxu0 0.0
    %346 = vmatpush1.xpose.msra.mxu0 %v313
    %347 = vmatprep.subr.mxu0 0.0
    %348 = vmatpush1.xpose.msra.mxu0 0.0
    %349 = vmatprep.subr.mxu0 0.0
    %350 = vmatpush1.xpose.msra.mxu0 0.0
    %351 = vmatprep.subr.mxu0 0.0
    %352 = vmatpush1.xpose.msra.mxu0 0.0
    %353 = vmatprep.subr.mxu0 0.0
    %354 = vmatpush1.xpose.msra.mxu0 0.0
    %355 = vmatprep.subr.mxu0 0.0
    %356 = vmatpush1.xpose.msra.mxu0 0.0
    %357 = vmatprep.subr.mxu0 0.0
    %358 = vmatpush1.xpose.msra.mxu0 0.0
    %359 = vmatprep.subr.mxu0 0.0
    %360 = vmatpush1.xpose.msra.mxu0 0.0
    %361 = vmatprep.subr.mxu0 0.0
    %362 = vmatpush1.xpose.msra.mxu0 0.0
    %363 = vmatprep.subr.mxu0 0.0
    %364 = vmatpush1.xpose.msra.mxu0 0.0
    %365 = vmatprep.subr.mxu0 0.0
    %366 = vmatpush1.xpose.msra.mxu0 0.0
    %367 = vmatprep.subr.mxu0 0.0
    %368 = vmatpush1.xpose.msra.mxu0 0.0
    %369 = vmatprep.subr.mxu0 0.0
    %370 = vmatpush1.xpose.msra.mxu0 0.0
    %371 = vmatprep.subr.mxu0 0.0
    %372 = vmatpush1.xpose.msra.mxu0 0.0
    %373 = vmatprep.subr.mxu0 0.0
    %374 = vmatpush1.xpose.msra.mxu0 0.0
    %375 = vmatprep.subr.mxu0 0.0
    %376 = vmatpush1.xpose.msra.mxu0 0.0
    %377 = vmatprep.subr.mxu0 0.0
    %378 = vmatpush1.xpose.msra.mxu0 0.0
    %379 = vmatprep.mubr.f32.mxu0 0.0
    %380 = vmatmul.mubr.f32.gmra.mrb[0].mxu0 %v265
    %v381 = vpop.f32.mrb[0].mxu0
    %v382 = vadd.f32 %v261, %v381
    %v383 = vpop.f32.mrb[0].mxu0
    %384 = vdwg.mxu0
    %v385 = vrot.slane %v382, 4
    %v386 = vmax.f32 %v382, %v385
    %v387 = vrot.slane %v386, 2
    %v388 = vmax.f32 %v386, %v387
    %v389 = vrot.slane %v388, 1
    %v390 = vmax.f32 %v388, %v389
    %v391 = vsub.f32 %v382, %v390
    %v392 = vmul.f32 %v391, 1.442695
    %v393 = vpow.pop %v392
    %v394 = vrot.slane %v393, 4
    %v395 = vadd.f32 %v393, %v394
    %v396 = vrot.slane %v395, 2
    %v397 = vadd.f32 %v395, %v396
    %v398 = vrot.slane %v397, 1
    %v399 = vadd.f32 %v397, %v398
    %v400 = vrcp.pop %v399
    %v401 = vmul.f32 %v393, %v400
    %402 = vst [vmem:[#allocation2] sm:$0xff] %v401
    // Predicated region
    $region22: #{tpu_custom_call.1} parent=1 // pred_check
      _
    $region23: #{tpu_custom_call.1} parent=1 // pred_check_branch
      %404 = sbr.rel (0) target = $region25
    $region24: #{tpu_custom_call.1} parent=1 // pred_region
      %s406 = ssub.s32 128, 128
      %407 = vsyncadd [#allocation3], %s406
      %s409 = sshll.u32 [#allocation2], 4
      %s410 = int_to_ptr.vmem [resolvable:$true] %s409
      %412 = dma.vmem_to_hbm [thread:$0]  %s410, 128, %s5, [#allocation3]
    $region25: #{tpu_custom_call.1} parent=1 // pred_fallthru
      _
    // Predicated region
    $region26: #{tpu_custom_call.1} parent=1 // pred_check
      _
    $region27: #{tpu_custom_call.1} parent=1 // pred_check_branch
      %414 = sbr.rel (0) target = $region29
    $region28: #{tpu_custom_call.1} parent=1 // pred_region
      %415 = dma.done [#allocation3], 128
    $region29: #{tpu_custom_call.1} parent=1 // pred_fallthru
      _
    %416 = vsyncpa [#allocation3], 1

</llo_original>
